<compile_context>
chip_gen: v5e
topology: v5e:2x2
jax: 0.10.0
libtpu: 0.0.40
codegen_flags: <defaults>
</compile_context>

<pallas_src>
import jax
import jax.numpy as jnp
from jax.experimental import pallas as pl
from jax.experimental.pallas import tpu as pltpu

IN_FEATURES = 28 * 28          # 784
HIDDEN = 128
OUT_FEATURES = 10
MAX_TILE_B = 512               # amortizes ~0.35us/step overhead; ~3.2 MiB x-tiles
MIN_PARALLEL_ROWS = 128        # below 2x this, one small tile is cheaper


def _cdiv(a, b):
    return (a + b - 1) // b


def _round_up(x, m):
    return ((x + m - 1) // m) * m


def _choose_tile_b(batch):
    """Pick the batch tile: 16-row granule (bf16 sublane packing), >=2 grid
    steps once there is enough work (v7x megacore), capped at MAX_TILE_B, and
    divisor-friendly so ragged padding stays under one sublane group."""
    if batch < 2 * MIN_PARALLEL_ROWS:
        return _round_up(batch, 16)
    grid_b = max(2, _cdiv(batch, MAX_TILE_B))
    return min(MAX_TILE_B, _round_up(_cdiv(batch, grid_b), 16))


def mlp_kernel(x_ref, w1_ref, b1_ref, w2_ref, b2_ref, o_ref):
    # Cast the f32 input tile to bf16 in-kernel (cheap VPU op, hidden by DMA).
    x = x_ref[...].astype(jnp.bfloat16)
    # Layer 1: (tile_b, 784) bf16 @ (784, 128) bf16 -> f32 accumulate on MXU.
    h = jnp.dot(x, w1_ref[...], preferred_element_type=jnp.float32)
    h = jnp.maximum(h + b1_ref[...], 0.0)          # bias + ReLU in f32 (VPU)
    # Layer 2: (tile_b, 128) bf16 @ (128, 10) bf16 -> f32; narrow output store
    # is masked but the kernel is HBM-bound, so it is hidden.
    out = jnp.dot(h.astype(jnp.bfloat16), w2_ref[...],
                  preferred_element_type=jnp.float32)
    o_ref[...] = (out + b2_ref[...]).astype(o_ref.dtype)


def prepare_params(w1, b1, w2, b2):
    """One-time weight preprocessing (hoisted out of the hot path).
    w1: (784, 128), b1: (128,), w2: (128, 10), b2: (10,) — PyTorch-equivalent
    parameters stored (in, out)."""
    return (w1.astype(jnp.bfloat16),
            b1.astype(jnp.float32).reshape(1, HIDDEN),
            w2.astype(jnp.bfloat16),
            b2.astype(jnp.float32).reshape(1, OUT_FEATURES))


def simple_nn_forward(x, params):
    """x: any shape that flattens to (-1, 784). Returns (B, 10) f32 logits,
    same semantics as the PyTorch module (bf16 matmul operands, f32 accum)."""
    w1p, b1p, w2p, b2p = params
    x2d = x.reshape(-1, IN_FEATURES).astype(jnp.float32)  # torch .view(-1, 784)
    batch = x2d.shape[0]

    tile_b = _choose_tile_b(batch)
    grid_b = _cdiv(batch, tile_b)

    return pl.pallas_call(
        mlp_kernel,
        out_shape=jax.ShapeDtypeStruct((batch, OUT_FEATURES), jnp.float32),
        grid_spec=pl.GridSpec(
            grid=(grid_b,),
            in_specs=[
                pl.BlockSpec((tile_b, IN_FEATURES), lambda i: (i, 0)),   # x tiles
                pl.BlockSpec((IN_FEATURES, HIDDEN), lambda i: (0, 0)),   # w1 resident
                pl.BlockSpec((1, HIDDEN), lambda i: (0, 0)),             # b1 resident
                pl.BlockSpec((HIDDEN, OUT_FEATURES), lambda i: (0, 0)),  # w2 resident
                pl.BlockSpec((1, OUT_FEATURES), lambda i: (0, 0)),       # b2 resident
            ],
            out_specs=pl.BlockSpec((tile_b, OUT_FEATURES), lambda i: (i, 0)),
        ),
        compiler_params=pltpu.CompilerParams(
            dimension_semantics=("parallel",),     # megacore-shard batch tiles
        ),
    )(x2d, w1p, b1p, w2p, b2p)


def init_params(key):
    """Deterministic init mimicking PyTorch Linear default
    (U[-1/sqrt(fan_in), 1/sqrt(fan_in)]); weights stored (in, out)."""
    k1, k2, k3, k4 = jax.random.split(key, 4)
    bound1 = 1.0 / jnp.sqrt(jnp.float32(IN_FEATURES))
    bound2 = 1.0 / jnp.sqrt(jnp.float32(HIDDEN))
    w1 = jax.random.uniform(k1, (IN_FEATURES, HIDDEN), jnp.float32, -bound1, bound1)
    b1 = jax.random.uniform(k2, (HIDDEN,), jnp.float32, -bound1, bound1)
    w2 = jax.random.uniform(k3, (HIDDEN, OUT_FEATURES), jnp.float32, -bound2, bound2)
    b2 = jax.random.uniform(k4, (OUT_FEATURES,), jnp.float32, -bound2, bound2)
    return w1, b1, w2, b2


if __name__ == "__main__":
    key = jax.random.PRNGKey(0)
    kx, kp = jax.random.split(key)

    # MNIST-like input: (batch, 1, 28, 28) NCHW, flattened inside the wrapper.
    batch = 8
    x = jax.random.normal(kx, (batch, 1, 28, 28), jnp.float32)
    w1, b1, w2, b2 = init_params(kp)

    params = prepare_params(w1, b1, w2, b2)        # one-time, off the hot path
    out = simple_nn_forward(x, params)
    out = jax.block_until_ready(out)

    # Pure-JAX f32 reference (kernel uses bf16 matmul operands -> loose tol).
    x2d = x.reshape(-1, IN_FEATURES)
    ref = jnp.maximum(x2d @ w1 + b1[None, :], 0.0) @ w2 + b2[None, :]
    assert out.shape == (batch, OUT_FEATURES)
    assert jnp.allclose(out, ref, atol=5e-2, rtol=5e-2), (
        float(jnp.max(jnp.abs(out - ref))))

    print("KERNEL_OK")
</pallas_src>

<mosaic_0001>
module attributes {stable_mosaic.version = 11 : i64} {
  func.func @mlp_kernel(%arg0: i32, %arg1: memref<16x784xf32, #tpu.memory_space<vmem>>, %arg2: memref<784x128xbf16, #tpu.memory_space<vmem>>, %arg3: memref<1x128xf32, #tpu.memory_space<vmem>>, %arg4: memref<128x10xbf16, #tpu.memory_space<vmem>>, %arg5: memref<1x10xf32, #tpu.memory_space<vmem>>, %arg6: memref<16x10xf32, #tpu.memory_space<vmem>>) attributes {dimension_semantics = [#tpu.dimension_semantics<parallel>], iteration_bounds = array<i64: 1>, scalar_prefetch = 0 : i64, scratch_operands = 0 : i64, tpu.core_type = #tpu.core_type<tc>, window_params = [{transform_indices = @transform_0, window_bounds = array<i64: 16, 784>}, {pipeline_mode = #tpu.pipeline_mode<synchronous>, transform_indices = @transform_1, window_bounds = array<i64: 784, 128>}, {pipeline_mode = #tpu.pipeline_mode<synchronous>, transform_indices = @transform_2, window_bounds = array<i64: 1, 128>}, {pipeline_mode = #tpu.pipeline_mode<synchronous>, transform_indices = @transform_3, window_bounds = array<i64: 128, 10>}, {pipeline_mode = #tpu.pipeline_mode<synchronous>, transform_indices = @transform_4, window_bounds = array<i64: 1, 10>}, {transform_indices = @transform_5, window_bounds = array<i64: 16, 10>}]} {
    %c0 = arith.constant 0 : index
    %c0_0 = arith.constant 0 : index
    %0 = vector.load %arg1[%c0, %c0_0] : memref<16x784xf32, #tpu.memory_space<vmem>>, vector<16x784xf32>
    %1 = arith.truncf %0 : vector<16x784xf32> to vector<16x784xbf16>
    %c0_1 = arith.constant 0 : index
    %c0_2 = arith.constant 0 : index
    %2 = vector.load %arg2[%c0_1, %c0_2] : memref<784x128xbf16, #tpu.memory_space<vmem>>, vector<784x128xbf16>
    %cst = arith.constant dense<0.000000e+00> : vector<16x128xf32>
    %3 = tpu.matmul %1, %2, %cst {dimension_numbers = #tpu.dot_dimension_numbers<[1], [0], [0], [1], [0, 0, 1, 1], [], []>} : vector<16x784xbf16>, vector<784x128xbf16>, vector<16x128xf32> -> vector<16x128xf32>
    %c0_3 = arith.constant 0 : index
    %c0_4 = arith.constant 0 : index
    %4 = vector.load %arg3[%c0_3, %c0_4] : memref<1x128xf32, #tpu.memory_space<vmem>>, vector<1x128xf32>
    %5 = vector.broadcast %4 : vector<1x128xf32> to vector<16x128xf32>
    %6 = arith.addf %3, %5 : vector<16x128xf32>
    %cst_5 = arith.constant 0.000000e+00 : f32
    %7 = vector.broadcast %cst_5 : f32 to vector<16x128xf32>
    %8 = arith.maximumf %6, %7 : vector<16x128xf32>
    %9 = arith.truncf %8 : vector<16x128xf32> to vector<16x128xbf16>
    %c0_6 = arith.constant 0 : index
    %c0_7 = arith.constant 0 : index
    %10 = vector.load %arg4[%c0_6, %c0_7] : memref<128x10xbf16, #tpu.memory_space<vmem>>, vector<128x10xbf16>
    %cst_8 = arith.constant dense<0.000000e+00> : vector<16x10xf32>
    %11 = tpu.matmul %9, %10, %cst_8 {dimension_numbers = #tpu.dot_dimension_numbers<[1], [0], [0], [1], [0, 0, 1, 1], [], []>} : vector<16x128xbf16>, vector<128x10xbf16>, vector<16x10xf32> -> vector<16x10xf32>
    %c0_9 = arith.constant 0 : index
    %c0_10 = arith.constant 0 : index
    %12 = vector.load %arg5[%c0_9, %c0_10] : memref<1x10xf32, #tpu.memory_space<vmem>>, vector<1x10xf32>
    %13 = vector.broadcast %12 : vector<1x10xf32> to vector<16x10xf32>
    %14 = arith.addf %11, %13 : vector<16x10xf32>
    %c0_11 = arith.constant 0 : index
    %c0_12 = arith.constant 0 : index
    %15 = vector.load %arg6[%c0_11, %c0_12] : memref<16x10xf32, #tpu.memory_space<vmem>>, vector<16x10xf32>
    tpu.vector_store %arg6[%c0_11, %c0_12], %14 {strides = array<i32>} : memref<16x10xf32, #tpu.memory_space<vmem>>, vector<16x10xf32>,
    return
  }
  func.func @transform_0(%arg0: i32) -> (i32, i32) {
    %c0_i32 = arith.constant 0 : i32
    %c0_i32_0 = arith.constant 0 : i32
    return %arg0, %c0_i32 : i32, i32
  }
  func.func @transform_1(%arg0: i32) -> (i32, i32) {
    %c0_i32 = arith.constant 0 : i32
    %c0_i32_0 = arith.constant 0 : i32
    %c0_i32_1 = arith.constant 0 : i32
    return %c0_i32, %c0_i32_0 : i32, i32
  }
  func.func @transform_2(%arg0: i32) -> (i32, i32) {
    %c0_i32 = arith.constant 0 : i32
    %c0_i32_0 = arith.constant 0 : i32
    %c0_i32_1 = arith.constant 0 : i32
    return %c0_i32, %c0_i32_0 : i32, i32
  }
  func.func @transform_3(%arg0: i32) -> (i32, i32) {
    %c0_i32 = arith.constant 0 : i32
    %c0_i32_0 = arith.constant 0 : i32
    %c0_i32_1 = arith.constant 0 : i32
    return %c0_i32, %c0_i32_0 : i32, i32
  }
  func.func @transform_4(%arg0: i32) -> (i32, i32) {
    %c0_i32 = arith.constant 0 : i32
    %c0_i32_0 = arith.constant 0 : i32
    %c0_i32_1 = arith.constant 0 : i32
    return %c0_i32, %c0_i32_0 : i32, i32
  }
  func.func @transform_5(%arg0: i32) -> (i32, i32) {
    %c0_i32 = arith.constant 0 : i32
    %c0_i32_0 = arith.constant 0 : i32
    return %arg0, %c0_i32 : i32, i32
  }
}

</mosaic_0001>

<llo_original>
// kernel: tpu_custom_call.1
$region0: #{tpu_custom_call.1}
  #allocation0 [shape = 'u32[]', space=smem, size = 0x4, offset = 0x4, fixed_abs, tag = 'smem constant byte address 0x4 - core index']
  #allocation1 [shape = 'u32[72,128]{1,0:T(1,128)}', space=vmem, size = 0x9000, scoped, tag = 'internal scratch']
  %s0 = inlined_call_operand.vmem [shape: f32[8,784], index: 0, kind: input, shape index: {}]
  %s1 = inlined_call_operand.hbm [shape: bf16[784,128], index: 1, kind: input, shape index: {}]
  %s2 = inlined_call_operand.vmem [shape: f32[1,128], index: 2, kind: input, shape index: {}]
  %s3 = inlined_call_operand.vmem [shape: bf16[128,10], index: 3, kind: input, shape index: {}]
  %s4 = inlined_call_operand.vmem [shape: f32[1,10], index: 4, kind: input, shape index: {}]
  %s5 = inlined_call_operand.hbm [shape: f32[8,10], index: 5, kind: output, shape index: {}]
  %s6 = sld [smem:[#allocation0]]
  $region34: #{tpu_custom_call.1} parent=0
    _
  %s8 = ssub.s32 1, %s6
  %s9 = scalar_select 0, %s8, %s6
  $region1: #{tpu_custom_call.1} parent=0
    #allocation2 [shape = 'u8[200704]{0}', space=vmem, size = 0x31000, scoped, tag = 'input window, operand 1, single buffered']
    #allocation3 [shape = 's32[1]{0}', space=sflag, size = 0x4, scoped, tag = 'scoped memory for tpu_custom_call.1']
    #allocation4 [shape = 's32[1]{0}', space=sflag, size = 0x4, scoped, tag = 'scoped memory for tpu_custom_call.1']
    #allocation5 [shape = 'u8[8192]{0}', space=vmem, size = 0x2000, scoped, tag = 'output window, operand 0, single buffered']
    %10 = vsyncpa [#allocation3], 0
    %11 = vsyncpa [#allocation4], 0
    // Predicated region
    $region2: #{tpu_custom_call.1} parent=1 // pred_check
      _
    $region3: #{tpu_custom_call.1} parent=1 // pred_check_branch
      %13 = sbr.rel (0) target = $region5
    $region4: #{tpu_custom_call.1} parent=1 // pred_region
      _
    $region5: #{tpu_custom_call.1} parent=1 // pred_fallthru
      _
    // Predicated region
    $region6: #{tpu_custom_call.1} parent=1 // pred_check
      _
    $region7: #{tpu_custom_call.1} parent=1 // pred_check_branch
      %15 = sbr.rel (0) target = $region9
    $region8: #{tpu_custom_call.1} parent=1 // pred_region
      %17 = vsyncadd [#allocation3], 0
      %s18 = sshll.u32 %s1, 4
      %s19 = int_to_ptr.hbm [resolvable:$true] %s18
      %s20 = sshll.u32 [#allocation2], 4
      %s21 = int_to_ptr.vmem [resolvable:$true] %s20
      %26 = dma.hbm_to_vmem [thread:$0]  %s19, 6272, %s21, [#allocation3], 64, 64, 4
    $region9: #{tpu_custom_call.1} parent=1 // pred_fallthru
      _
    // Predicated region
    $region10: #{tpu_custom_call.1} parent=1 // pred_check
      _
    $region11: #{tpu_custom_call.1} parent=1 // pred_check_branch
      %28 = sbr.rel (0) target = $region13
    $region12: #{tpu_custom_call.1} parent=1 // pred_region
      _
    $region13: #{tpu_custom_call.1} parent=1 // pred_fallthru
      _
    // Predicated region
    $region14: #{tpu_custom_call.1} parent=1 // pred_check
      _
    $region15: #{tpu_custom_call.1} parent=1 // pred_check_branch
      %30 = sbr.rel (0) target = $region17
    $region16: #{tpu_custom_call.1} parent=1 // pred_region
      _
    $region17: #{tpu_custom_call.1} parent=1 // pred_fallthru
      _
    // Predicated region
    $region18: #{tpu_custom_call.1} parent=1 // pred_check
      _
    $region19: #{tpu_custom_call.1} parent=1 // pred_check_branch
      %32 = sbr.rel (0) target = $region21
    $region20: #{tpu_custom_call.1} parent=1 // pred_region
      _
    $region21: #{tpu_custom_call.1} parent=1 // pred_fallthru
      _
    // Predicated region
    $region22: #{tpu_custom_call.1} parent=1 // pred_check
      _
    $region23: #{tpu_custom_call.1} parent=1 // pred_check_branch
      %34 = sbr.rel (0) target = $region25
    $region24: #{tpu_custom_call.1} parent=1 // pred_region
      %36 = dma.done [#allocation3], 6272
    $region25: #{tpu_custom_call.1} parent=1 // pred_fallthru
      _
    %v38 = vld [vmem:[%s0] sm:$0xff]
    %v39 = vld [vmem:[%s0 + $0x8] sm:$0xff]
    %v40 = vld [vmem:[%s0 + $0x10] sm:$0xff]
    %v41 = vld [vmem:[%s0 + $0x18] sm:$0xff]
    %v42 = vld [vmem:[%s0 + $0x20] sm:$0xff]
    %v43 = vld [vmem:[%s0 + $0x28] sm:$0xff]
    %v44 = vld [vmem:[%s0 + $0x30] sm:$0xff]
    %v45 = vld [vmem:[%s0 + $0x38] sm:$0xff]
    %v46 = vld [vmem:[%s0 + $0x40] sm:$0xff]
    %v47 = vld [vmem:[%s0 + $0x48] sm:$0xff]
    %v48 = vld [vmem:[%s0 + $0x50] sm:$0xff]
    %v49 = vld [vmem:[%s0 + $0x58] sm:$0xff]
    %v50 = vld [vmem:[%s0 + $0x60] sm:$0xff]
    %v51 = vld [vmem:[%s0 + $0x68] sm:$0xff]
    %v52 = vpack.c.bf16 %v45, %v38
    %v53 = vpack.c.bf16 %v46, %v39
    %v54 = vpack.c.bf16 %v47, %v40
    %v55 = vpack.c.bf16 %v48, %v41
    %v56 = vpack.c.bf16 %v49, %v42
    %v57 = vpack.c.bf16 %v50, %v43
    %v58 = vpack.c.bf16 %v51, %v44
    %v59 = vld [vmem:[#allocation2] sm:$0xf]
    %v60 = vld [vmem:[#allocation2 + $0x4] sm:$0xf]
    %v61 = vld [vmem:[#allocation2 + $0x8] sm:$0xf]
    %v62 = vld [vmem:[#allocation2 + $0xc] sm:$0xf]
    %v63 = vld [vmem:[#allocation2 + $0x10] sm:$0xf]
    %v64 = vld [vmem:[#allocation2 + $0x14] sm:$0xf]
    %v65 = vld [vmem:[#allocation2 + $0x18] sm:$0xf]
    %v66 = vld [vmem:[#allocation2 + $0x1c] sm:$0xf]
    %v67 = vld [vmem:[#allocation2 + $0x20] sm:$0xf]
    %v68 = vld [vmem:[#allocation2 + $0x24] sm:$0xf]
    %v69 = vld [vmem:[#allocation2 + $0x28] sm:$0xf]
    %v70 = vld [vmem:[#allocation2 + $0x2c] sm:$0xf]
    %v71 = vld [vmem:[#allocation2 + $0x30] sm:$0xf]
    %v72 = vld [vmem:[#allocation2 + $0x34] sm:$0xf]
    %v73 = vld [vmem:[#allocation2 + $0x38] sm:$0xf]
    %v74 = vld [vmem:[#allocation2 + $0x3c] sm:$0xf]
    %v75 = vld [vmem:[#allocation2 + $0x40] sm:$0xf]
    %v76 = vld [vmem:[#allocation2 + $0x44] sm:$0xf]
    %v77 = vld [vmem:[#allocation2 + $0x48] sm:$0xf]
    %v78 = vld [vmem:[#allocation2 + $0x4c] sm:$0xf]
    %v79 = vld [vmem:[#allocation2 + $0x50] sm:$0xf]
    %v80 = vld [vmem:[#allocation2 + $0x54] sm:$0xf]
    %v81 = vld [vmem:[#allocation2 + $0x58] sm:$0xf]
    %v82 = vld [vmem:[#allocation2 + $0x5c] sm:$0xf]
    %v83 = vld [vmem:[#allocation2 + $0x60] sm:$0xf]
    %v84 = vld [vmem:[#allocation2 + $0x64] sm:$0xf]
    %v85 = vld [vmem:[#allocation2 + $0x68] sm:$0xf]
    %v86 = vld [vmem:[#allocation2 + $0x6c] sm:$0xf]
    %v87 = vld [vmem:[#allocation2 + $0x70] sm:$0xf]
    %v88 = vld [vmem:[#allocation2 + $0x74] sm:$0xf]
    %v89 = vld [vmem:[#allocation2 + $0x78] sm:$0xf]
    %v90 = vld [vmem:[#allocation2 + $0x7c] sm:$0xf]
    %v91 = vld [vmem:[#allocation2 + $0x80] sm:$0xf]
    %v92 = vld [vmem:[#allocation2 + $0x84] sm:$0xf]
    %v93 = vld [vmem:[#allocation2 + $0x88] sm:$0xf]
    %v94 = vld [vmem:[#allocation2 + $0x8c] sm:$0xf]
    %v95 = vld [vmem:[#allocation2 + $0x90] sm:$0xf]
    %v96 = vld [vmem:[#allocation2 + $0x94] sm:$0xf]
    %v97 = vld [vmem:[#allocation2 + $0x98] sm:$0xf]
    %v98 = vld [vmem:[#allocation2 + $0x9c] sm:$0xf]
    %v99 = vld [vmem:[#allocation2 + $0xa0] sm:$0xf]
    %v100 = vld [vmem:[#allocation2 + $0xa4] sm:$0xf]
    %v101 = vld [vmem:[#allocation2 + $0xa8] sm:$0xf]
    %v102 = vld [vmem:[#allocation2 + $0xac] sm:$0xf]
    %v103 = vld [vmem:[#allocation2 + $0xb0] sm:$0xf]
    %v104 = vld [vmem:[#allocation2 + $0xb4] sm:$0xf]
    %v105 = vld [vmem:[#allocation2 + $0xb8] sm:$0xf]
    %v106 = vld [vmem:[#allocation2 + $0xbc] sm:$0xf]
    %v107 = vld [vmem:[#allocation2 + $0xc0] sm:$0xf]
    %v108 = vld [vmem:[#allocation2 + $0xc4] sm:$0xf]
    %v109 = vld [vmem:[#allocation2 + $0xc8] sm:$0xf]
    %v110 = vld [vmem:[#allocation2 + $0xcc] sm:$0xf]
    %v111 = vld [vmem:[#allocation2 + $0xd0] sm:$0xf]
    %v112 = vld [vmem:[#allocation2 + $0xd4] sm:$0xf]
    %v113 = vld [vmem:[#allocation2 + $0xd8] sm:$0xf]
    %v114 = vld [vmem:[#allocation2 + $0xdc] sm:$0xf]
    %v115 = vld [vmem:[#allocation2 + $0xe0] sm:$0xf]
    %v116 = vld [vmem:[#allocation2 + $0xe4] sm:$0xf]
    %v117 = vld [vmem:[#allocation2 + $0xe8] sm:$0xf]
    %v118 = vld [vmem:[#allocation2 + $0xec] sm:$0xf]
    %v119 = vld [vmem:[#allocation2 + $0xf0] sm:$0xf]
    %v120 = vld [vmem:[#allocation2 + $0xf4] sm:$0xf]
    %v121 = vld [vmem:[#allocation2 + $0xf8] sm:$0xf]
    %v122 = vld [vmem:[#allocation2 + $0xfc] sm:$0xf]
    %v123 = vld [vmem:[#allocation2 + $0x100] sm:$0xf]
    %v124 = vld [vmem:[#allocation2 + $0x104] sm:$0xf]
    %v125 = vld [vmem:[#allocation2 + $0x108] sm:$0xf]
    %v126 = vld [vmem:[#allocation2 + $0x10c] sm:$0xf]
    %v127 = vld [vmem:[#allocation2 + $0x110] sm:$0xf]
    %v128 = vld [vmem:[#allocation2 + $0x114] sm:$0xf]
    %v129 = vld [vmem:[#allocation2 + $0x118] sm:$0xf]
    %v130 = vld [vmem:[#allocation2 + $0x11c] sm:$0xf]
    %v131 = vld [vmem:[#allocation2 + $0x120] sm:$0xf]
    %v132 = vld [vmem:[#allocation2 + $0x124] sm:$0xf]
    %v133 = vld [vmem:[#allocation2 + $0x128] sm:$0xf]
    %v134 = vld [vmem:[#allocation2 + $0x12c] sm:$0xf]
    %v135 = vld [vmem:[#allocation2 + $0x130] sm:$0xf]
    %v136 = vld [vmem:[#allocation2 + $0x134] sm:$0xf]
    %v137 = vld [vmem:[#allocation2 + $0x138] sm:$0xf]
    %v138 = vld [vmem:[#allocation2 + $0x13c] sm:$0xf]
    %v139 = vld [vmem:[#allocation2 + $0x140] sm:$0xf]
    %v140 = vld [vmem:[#allocation2 + $0x144] sm:$0xf]
    %v141 = vld [vmem:[#allocation2 + $0x148] sm:$0xf]
    %v142 = vld [vmem:[#allocation2 + $0x14c] sm:$0xf]
    %v143 = vld [vmem:[#allocation2 + $0x150] sm:$0xf]
    %v144 = vld [vmem:[#allocation2 + $0x154] sm:$0xf]
    %v145 = vld [vmem:[#allocation2 + $0x158] sm:$0xf]
    %v146 = vld [vmem:[#allocation2 + $0x15c] sm:$0xf]
    %v147 = vld [vmem:[#allocation2 + $0x160] sm:$0xf]
    %v148 = vld [vmem:[#allocation2 + $0x164] sm:$0xf]
    %v149 = vld [vmem:[#allocation2 + $0x168] sm:$0xf]
    %v150 = vld [vmem:[#allocation2 + $0x16c] sm:$0xf]
    %v151 = vld [vmem:[#allocation2 + $0x170] sm:$0xf]
    %v152 = vld [vmem:[#allocation2 + $0x174] sm:$0xf]
    %v153 = vld [vmem:[#allocation2 + $0x178] sm:$0xf]
    %v154 = vld [vmem:[#allocation2 + $0x17c] sm:$0xf]
    %v155 = vld [vmem:[#allocation2 + $0x180] sm:$0xf]
    %v156 = vld [vmem:[#allocation2 + $0x184] sm:$0xf]
    %v157 = vld [vmem:[%s2] sm:$0x1]
    %v159 = vperm.slane %v157, 0
    %v259 = vunpack.c.l.b16 %v59
    %v260 = vunpack.c.l.b16 %v60
    %v261 = vunpack.c.l.b16 %v61
    %v262 = vunpack.c.l.b16 %v62
    %v263 = vunpack.c.l.b16 %v63
    %v264 = vunpack.c.l.b16 %v64
    %v265 = vunpack.c.l.b16 %v65
    %v266 = vunpack.c.l.b16 %v66
    %v267 = vunpack.c.l.b16 %v67
    %v268 = vunpack.c.l.b16 %v68
    %v269 = vunpack.c.l.b16 %v69
    %v270 = vunpack.c.l.b16 %v70
    %v271 = vunpack.c.l.b16 %v71
    %v272 = vunpack.c.l.b16 %v72
    %v273 = vunpack.c.l.b16 %v73
    %v274 = vunpack.c.l.b16 %v74
    %v275 = vunpack.c.l.b16 %v75
    %v276 = vunpack.c.l.b16 %v76
    %v277 = vunpack.c.l.b16 %v77
    %v278 = vunpack.c.l.b16 %v78
    %v279 = vunpack.c.l.b16 %v79
    %v280 = vunpack.c.l.b16 %v80
    %v281 = vunpack.c.l.b16 %v81
    %v282 = vunpack.c.l.b16 %v82
    %v283 = vunpack.c.l.b16 %v83
    %v284 = vunpack.c.l.b16 %v84
    %v285 = vunpack.c.l.b16 %v85
    %v286 = vunpack.c.l.b16 %v86
    %v287 = vunpack.c.l.b16 %v87
    %v288 = vunpack.c.l.b16 %v88
    %v289 = vunpack.c.l.b16 %v89
    %v290 = vunpack.c.l.b16 %v90
    %v291 = vunpack.c.l.b16 %v91
    %v292 = vunpack.c.l.b16 %v92
    %v293 = vunpack.c.l.b16 %v93
    %v294 = vunpack.c.l.b16 %v94
    %v295 = vunpack.c.l.b16 %v95
    %v296 = vunpack.c.l.b16 %v96
    %v297 = vunpack.c.l.b16 %v97
    %v298 = vunpack.c.l.b16 %v98
    %v299 = vunpack.c.l.b16 %v99
    %v300 = vunpack.c.l.b16 %v100
    %v301 = vunpack.c.l.b16 %v101
    %v302 = vunpack.c.l.b16 %v102
    %v303 = vunpack.c.l.b16 %v103
    %v304 = vunpack.c.l.b16 %v104
    %v305 = vunpack.c.l.b16 %v105
    %v306 = vunpack.c.l.b16 %v106
    %v307 = vunpack.c.l.b16 %v107
    %v308 = vunpack.c.l.b16 %v108
    %v309 = vunpack.c.l.b16 %v109
    %v310 = vunpack.c.l.b16 %v110
    %v311 = vunpack.c.l.b16 %v111
    %v312 = vunpack.c.l.b16 %v112
    %v313 = vunpack.c.l.b16 %v113
    %v314 = vunpack.c.l.b16 %v114
    %v315 = vunpack.c.l.b16 %v115
    %v316 = vunpack.c.l.b16 %v116
    %v317 = vunpack.c.l.b16 %v117
    %v318 = vunpack.c.l.b16 %v118
    %v319 = vunpack.c.l.b16 %v119
    %v320 = vunpack.c.l.b16 %v120
    %v321 = vunpack.c.l.b16 %v121
    %v322 = vunpack.c.l.b16 %v122
    %v323 = vunpack.c.l.b16 %v123
    %v324 = vunpack.c.l.b16 %v124
    %v325 = vunpack.c.l.b16 %v125
    %v326 = vunpack.c.l.b16 %v126
    %v327 = vunpack.c.l.b16 %v127
    %v328 = vunpack.c.l.b16 %v128
    %v329 = vunpack.c.l.b16 %v129
    %v330 = vunpack.c.l.b16 %v130
    %v331 = vunpack.c.l.b16 %v131
    %v332 = vunpack.c.l.b16 %v132
    %v333 = vunpack.c.l.b16 %v133
    %v334 = vunpack.c.l.b16 %v134
    %v335 = vunpack.c.l.b16 %v135
    %v336 = vunpack.c.l.b16 %v136
    %v337 = vunpack.c.l.b16 %v137
    %v338 = vunpack.c.l.b16 %v138
    %v339 = vunpack.c.l.b16 %v139
    %v340 = vunpack.c.l.b16 %v140
    %v341 = vunpack.c.l.b16 %v141
    %v342 = vunpack.c.l.b16 %v142
    %v343 = vunpack.c.l.b16 %v143
    %v344 = vunpack.c.l.b16 %v144
    %v345 = vunpack.c.l.b16 %v145
    %v346 = vunpack.c.l.b16 %v146
    %v347 = vunpack.c.l.b16 %v147
    %v348 = vunpack.c.l.b16 %v148
    %v349 = vunpack.c.l.b16 %v149
    %v350 = vunpack.c.l.b16 %v150
    %v351 = vunpack.c.l.b16 %v151
    %v352 = vunpack.c.l.b16 %v152
    %v353 = vunpack.c.l.b16 %v153
    %v354 = vunpack.c.l.b16 %v154
    %v355 = vunpack.c.l.b16 %v155
    %v356 = vunpack.c.l.b16 %v156
    %v357 = vpack.c.b16 %v260, %v259
    %v358 = vpack.c.b16 %v262, %v261
    %v359 = vpack.c.b16 %v264, %v263
    %v360 = vpack.c.b16 %v266, %v265
    %v361 = vpack.c.b16 %v268, %v267
    %v362 = vpack.c.b16 %v270, %v269
    %v363 = vpack.c.b16 %v272, %v271
    %v364 = vpack.c.b16 %v274, %v273
    %v365 = vpack.c.b16 %v276, %v275
    %v366 = vpack.c.b16 %v278, %v277
    %v367 = vpack.c.b16 %v280, %v279
    %v368 = vpack.c.b16 %v282, %v281
    %v369 = vpack.c.b16 %v284, %v283
    %v370 = vpack.c.b16 %v286, %v285
    %v371 = vpack.c.b16 %v288, %v287
    %v372 = vpack.c.b16 %v290, %v289
    %v373 = vpack.c.b16 %v292, %v291
    %v374 = vpack.c.b16 %v294, %v293
    %v375 = vpack.c.b16 %v296, %v295
    %v376 = vpack.c.b16 %v298, %v297
    %v377 = vpack.c.b16 %v300, %v299
    %v378 = vpack.c.b16 %v302, %v301
    %v379 = vpack.c.b16 %v304, %v303
    %v380 = vpack.c.b16 %v306, %v305
    %v381 = vpack.c.b16 %v308, %v307
    %v382 = vpack.c.b16 %v310, %v309
    %v383 = vpack.c.b16 %v312, %v311
    %v384 = vpack.c.b16 %v314, %v313
    %v385 = vpack.c.b16 %v316, %v315
    %v386 = vpack.c.b16 %v318, %v317
    %v387 = vpack.c.b16 %v320, %v319
    %v388 = vpack.c.b16 %v322, %v321
    %v389 = vpack.c.b16 %v324, %v323
    %v390 = vpack.c.b16 %v326, %v325
    %v391 = vpack.c.b16 %v328, %v327
    %v392 = vpack.c.b16 %v330, %v329
    %v393 = vpack.c.b16 %v332, %v331
    %v394 = vpack.c.b16 %v334, %v333
    %v395 = vpack.c.b16 %v336, %v335
    %v396 = vpack.c.b16 %v338, %v337
    %v397 = vpack.c.b16 %v340, %v339
    %v398 = vpack.c.b16 %v342, %v341
    %v399 = vpack.c.b16 %v344, %v343
    %v400 = vpack.c.b16 %v346, %v345
    %v401 = vpack.c.b16 %v348, %v347
    %v402 = vpack.c.b16 %v350, %v349
    %v403 = vpack.c.b16 %v352, %v351
    %v404 = vpack.c.b16 %v354, %v353
    %v405 = vpack.c.b16 %v356, %v355
    %vm455 = vcmask 130048
    %v457 = vsel %vm455, %v58, 0
    %459 = vmatpush.bf16.msra.mxu0 %v364
    %460 = vmatpush.bf16.msra.mxu0 %v363
    %461 = vmatpush.bf16.msra.mxu0 %v362
    %462 = vmatpush.bf16.msra.mxu0 %v361
    %463 = vmatpush.bf16.msra.mxu0 %v360
    %464 = vmatpush.bf16.msra.mxu0 %v359
    %465 = vmatpush.bf16.msra.mxu0 %v358
    %466 = vmatpush.bf16.msra.mxu0 %v357
    %467 = vmatmul.bf16.gmra.mxu0 %v52
    %v468 = vpop.f32.mrf.mxu0
    %v469 = vadd.f32 %v159, %v468
    %v470 = vpop.f32.mrf.mxu0
    %v471 = vadd.f32 %v159, %v470
    %472 = vdwg.mxu0
    %473 = vmatpush.bf16.msra.mxu0 %v372
    %474 = vmatpush.bf16.msra.mxu0 %v371
    %475 = vmatpush.bf16.msra.mxu0 %v370
    %476 = vmatpush.bf16.msra.mxu0 %v369
    %477 = vmatpush.bf16.msra.mxu0 %v368
    %478 = vmatpush.bf16.msra.mxu0 %v367
    %479 = vmatpush.bf16.msra.mxu0 %v366
    %480 = vmatpush.bf16.msra.mxu0 %v365
    %481 = vmatmul.bf16.gmra.mxu0 %v53
    %v482 = vpop.f32.mrf.mxu0
    %v483 = vadd.f32 %v469, %v482
    %v484 = vpop.f32.mrf.mxu0
    %v485 = vadd.f32 %v471, %v484
    %486 = vdwg.mxu0
    %487 = vmatpush.bf16.msra.mxu0 %v380
    %488 = vmatpush.bf16.msra.mxu0 %v379
    %489 = vmatpush.bf16.msra.mxu0 %v378
    %490 = vmatpush.bf16.msra.mxu0 %v377
    %491 = vmatpush.bf16.msra.mxu0 %v376
    %492 = vmatpush.bf16.msra.mxu0 %v375
    %493 = vmatpush.bf16.msra.mxu0 %v374
    %494 = vmatpush.bf16.msra.mxu0 %v373
    %495 = vmatmul.bf16.gmra.mxu0 %v54
    %v496 = vpop.f32.mrf.mxu0
    %v497 = vadd.f32 %v483, %v496
    %v498 = vpop.f32.mrf.mxu0
    %v499 = vadd.f32 %v485, %v498
    %500 = vdwg.mxu0
    %501 = vmatpush.bf16.msra.mxu0 %v388
    %502 = vmatpush.bf16.msra.mxu0 %v387
    %503 = vmatpush.bf16.msra.mxu0 %v386
    %504 = vmatpush.bf16.msra.mxu0 %v385
    %505 = vmatpush.bf16.msra.mxu0 %v384
    %506 = vmatpush.bf16.msra.mxu0 %v383
    %507 = vmatpush.bf16.msra.mxu0 %v382
    %508 = vmatpush.bf16.msra.mxu0 %v381
    %509 = vmatmul.bf16.gmra.mxu0 %v55
    %v510 = vpop.f32.mrf.mxu0
    %v511 = vadd.f32 %v497, %v510
    %v512 = vpop.f32.mrf.mxu0
    %v513 = vadd.f32 %v499, %v512
    %514 = vdwg.mxu0
    %515 = vmatpush.bf16.msra.mxu0 %v396
    %516 = vmatpush.bf16.msra.mxu0 %v395
    %517 = vmatpush.bf16.msra.mxu0 %v394
    %518 = vmatpush.bf16.msra.mxu0 %v393
    %519 = vmatpush.bf16.msra.mxu0 %v392
    %520 = vmatpush.bf16.msra.mxu0 %v391
    %521 = vmatpush.bf16.msra.mxu0 %v390
    %522 = vmatpush.bf16.msra.mxu0 %v389
    %523 = vmatmul.bf16.gmra.mxu0 %v56
    %v524 = vpop.f32.mrf.mxu0
    %v525 = vadd.f32 %v511, %v524
    %v526 = vpop.f32.mrf.mxu0
    %v527 = vadd.f32 %v513, %v526
    %528 = vdwg.mxu0
    %529 = vmatpush.bf16.msra.mxu0 %v404
    %530 = vmatpush.bf16.msra.mxu0 %v403
    %531 = vmatpush.bf16.msra.mxu0 %v402
    %532 = vmatpush.bf16.msra.mxu0 %v401
    %533 = vmatpush.bf16.msra.mxu0 %v400
    %534 = vmatpush.bf16.msra.mxu0 %v399
    %535 = vmatpush.bf16.msra.mxu0 %v398
    %536 = vmatpush.bf16.msra.mxu0 %v397
    %537 = vmatmul.bf16.gmra.mxu0 %v57
    %v538 = vpop.f32.mrf.mxu0
    %v539 = vadd.f32 %v525, %v538
    %v540 = vpop.f32.mrf.mxu0
    %v541 = vadd.f32 %v527, %v540
    %542 = vdwg.mxu0
    %543 = vmatpush.bf16.msra.mxu0 0
    %544 = vmatpush.bf16.msra.mxu0 0
    %545 = vmatpush.bf16.msra.mxu0 0
    %546 = vmatpush.bf16.msra.mxu0 0
    %547 = vmatpush.bf16.msra.mxu0 0
    %548 = vmatpush.bf16.msra.mxu0 0
    %549 = vmatpush.bf16.msra.mxu0 0
    %550 = vmatpush.bf16.msra.mxu0 %v405
    %551 = vmatmul.bf16.gmra.mxu0 %v457
    %v552 = vpop.f32.mrf.mxu0
    %v553 = vadd.f32 %v539, %v552
    %v554 = vpop.f32.mrf.mxu0
    %v555 = vadd.f32 %v541, %v554
    %556 = vdwg.mxu0
    %v557 = vmax.f32 %v553, 0.0
    %v558 = vmax.f32 %v555, 0.0
    %v559 = vpack.c.bf16 %v558, %v557
    %v560 = vld [vmem:[%s3] sm:$0xf]
    %v561 = vld [vmem:[%s3 + $0x4] sm:$0xf]
    %v562 = vld [vmem:[%s3 + $0x8] sm:$0xf]
    %v563 = vld [vmem:[%s3 + $0xc] sm:$0xf]
    %v564 = vld [vmem:[%s3 + $0x10] sm:$0xf]
    %v565 = vld [vmem:[%s3 + $0x14] sm:$0xf]
    %v566 = vld [vmem:[%s3 + $0x18] sm:$0xf]
    %v567 = vld [vmem:[%s3 + $0x1c] sm:$0xf]
    %v568 = vld [vmem:[%s3 + $0x20] sm:$0xf]
    %v569 = vld [vmem:[%s3 + $0x24] sm:$0xf]
    %v570 = vld [vmem:[%s3 + $0x28] sm:$0xf]
    %v571 = vld [vmem:[%s3 + $0x2c] sm:$0xf]
    %v572 = vld [vmem:[%s3 + $0x30] sm:$0xf]
    %v573 = vld [vmem:[%s3 + $0x34] sm:$0xf]
    %v574 = vld [vmem:[%s3 + $0x38] sm:$0xf]
    %v575 = vld [vmem:[%s3 + $0x3c] sm:$0xf]
    %v576 = vld [vmem:[%s4] sm:$0x1]
    %v578 = vperm.slane %v576, 0
    %v596 = vunpack.c.l.b16 %v560
    %v597 = vunpack.c.l.b16 %v561
    %v598 = vunpack.c.l.b16 %v562
    %v599 = vunpack.c.l.b16 %v563
    %v600 = vunpack.c.l.b16 %v564
    %v601 = vunpack.c.l.b16 %v565
    %v602 = vunpack.c.l.b16 %v566
    %v603 = vunpack.c.l.b16 %v567
    %v604 = vunpack.c.l.b16 %v568
    %v605 = vunpack.c.l.b16 %v569
    %v606 = vunpack.c.l.b16 %v570
    %v607 = vunpack.c.l.b16 %v571
    %v608 = vunpack.c.l.b16 %v572
    %v609 = vunpack.c.l.b16 %v573
    %v610 = vunpack.c.l.b16 %v574
    %v611 = vunpack.c.l.b16 %v575
    %v612 = vpack.c.b16 %v597, %v596
    %v613 = vpack.c.b16 %v599, %v598
    %v614 = vpack.c.b16 %v601, %v600
    %v615 = vpack.c.b16 %v603, %v602
    %v616 = vpack.c.b16 %v605, %v604
    %v617 = vpack.c.b16 %v607, %v606
    %v618 = vpack.c.b16 %v609, %v608
    %v619 = vpack.c.b16 %v611, %v610
    %628 = vmatpush.bf16.msra.mxu0 %v619
    %629 = vmatpush.bf16.msra.mxu0 %v618
    %630 = vmatpush.bf16.msra.mxu0 %v617
    %631 = vmatpush.bf16.msra.mxu0 %v616
    %632 = vmatpush.bf16.msra.mxu0 %v615
    %633 = vmatpush.bf16.msra.mxu0 %v614
    %634 = vmatpush.bf16.msra.mxu0 %v613
    %635 = vmatpush.bf16.msra.mxu0 %v612
    %636 = vmatmul.bf16.gmra.mxu0 %v559
    %v637 = vpop.f32.mrf.mxu0
    %v638 = vadd.f32 %v578, %v637
    %v639 = vpop.f32.mrf.mxu0
    %v640 = vadd.f32 %v578, %v639
    %641 = vdwg.mxu0
    %vm642 = vcmask 80896
    %643 = vst.msk [vmem:[#allocation5] sm:$0xff] %vm642, %v638
    %644 = vst.msk [vmem:[#allocation5 + $0x8] sm:$0xff] %vm642, %v640
    // Predicated region
    $region26: #{tpu_custom_call.1} parent=1 // pred_check
      _
    $region27: #{tpu_custom_call.1} parent=1 // pred_check_branch
      %646 = sbr.rel (0) target = $region29
    $region28: #{tpu_custom_call.1} parent=1 // pred_region
      %648 = vsyncadd [#allocation4], 128
      %s649 = sshll.u32 [#allocation5], 4
      %s650 = int_to_ptr.vmem [resolvable:$true] %s649
      %s651 = sshll.u32 %s5, 4
      %s652 = int_to_ptr.hbm [resolvable:$true] %s651
      %657 = dma.vmem_to_hbm [thread:$0]  %s650, 128, %s652, [#allocation4], 128, 128, 8
    $region29: #{tpu_custom_call.1} parent=1 // pred_fallthru
      _
    // Predicated region
    $region30: #{tpu_custom_call.1} parent=1 // pred_check
      _
    $region31: #{tpu_custom_call.1} parent=1 // pred_check_branch
      %659 = sbr.rel (0) target = $region33
    $region32: #{tpu_custom_call.1} parent=1 // pred_region
      %661 = dma.done [#allocation4], 256
    $region33: #{tpu_custom_call.1} parent=1 // pred_fallthru
      _
    %662 = vsyncpa [#allocation3], 1
    %663 = vsyncpa [#allocation4], 1

</llo_original>
